<compile_context>
chip_gen: v6e
topology: v6e:2x2x1
jax: 0.10.0
libtpu: 0.0.40
codegen_flags: <defaults>
</compile_context>

<pallas_src>
import jax
import jax.numpy as jnp
from jax.experimental import pallas as pl
from jax.experimental.pallas import tpu as pltpu

IN_DIM = 512
HID_DIM = 50
HID_PAD = 64     # 50 padded up to a sublane-friendly width
OUT_DIM = 1


def _is_v5e():
    try:
        kind = jax.devices()[0].device_kind.lower()
    except Exception:
        return False
    return ("v5 lite" in kind) or ("v5e" in kind) or ("v5lite" in kind)


def vgg10_dis_kernel(x_ref, w1_ref, p_ref, b2_ref, o_ref):
    """Fused fc1 -> relu -> (dropout=id) -> fc2 -> sigmoid for one batch tile.

    x_ref:  (tb, 512)  native dtype (f32 or bf16)  batch tile
    w1_ref: (64, 512)  bf16   fc1 weight (rows 50..63 are zero)
    p_ref:  (64, 2)    f32    column 0 = b1, column 1 = w2 (rows 50..63 zero)
    b2_ref: (1, 1)     f32    fc2 bias (SMEM scalar)
    o_ref:  (1, tb)    f32    lane-dense output tile (batch on lanes)
    """
    # In-kernel bf16 cast (VPU) hides under the x DMA; keeps wrapper traffic at
    # exactly one read of x in its native dtype.
    x_bf = x_ref[...].astype(jnp.bfloat16)

    # fc1, transposed orientation: h_t[j, t] = sum_d w1[j, d] * x[t, d]
    # A @ B^T (MXU transposed-rhs), bf16 inputs, f32 accumulation -> (64, tb)
    h_t = jax.lax.dot_general(
        w1_ref[...], x_bf,
        dimension_numbers=(((1,), (1,)), ((), ())),
        preferred_element_type=jnp.float32)

    b1_col = p_ref[:, 0:1]                      # (64, 1)
    w2_col = p_ref[:, 1:2]                      # (64, 1)
    h_t = jnp.maximum(h_t + b1_col, 0.0)        # bias + relu (VPU)

    # dropout: identity (inference / eval mode)
    # TODO(synk): training-mode dropout not implemented.

    # fc2 as VPU multiply + sublane reduce (keeps the N=1 matmul off the MXU);
    # result is already lane-dense: (1, tb)
    y_t = jnp.sum(h_t * w2_col, axis=0, keepdims=True) + b2_ref[0, 0]
    o_ref[...] = jax.nn.sigmoid(y_t).astype(o_ref.dtype)


def vgg10_dis_forward(x, w1, b1, w2, b2, *, tb=None):
    """x: [B, 512]; w1: [50, 512]; b1: [50]; w2: [1, 50]; b2: [1] (PyTorch layout)."""
    x = jnp.asarray(x)
    assert x.ndim == 2 and x.shape[1] == IN_DIM
    B = x.shape[0]

    if tb is None:
        # Single grid step while the x slab is small; large batches get
        # roofline-sized tiles (v5e stays a bit smaller for its 16 MiB default
        # scoped VMEM, though we also raise vmem_limit_bytes below).
        tb_max = 2048 if _is_v5e() else 4096
        tb = B if B <= tb_max else tb_max
    tb = min(tb, B)
    assert tb == B or tb % 128 == 0, \
        "tb must equal B or be a multiple of 128 (lane-dense output tiles)"
    n_tiles = pl.cdiv(B, tb)   # ragged tail handled by Pallas partial-block masking

    # ---- tiny one-time parameter prep (64x512 etc.) ----
    # Padded rows 50..63 MUST remain exactly zero (ReLU(0)*0 == 0 invariant).
    w1_p = jnp.zeros((HID_PAD, IN_DIM), jnp.bfloat16).at[:HID_DIM].set(
        jnp.asarray(w1, jnp.bfloat16))
    p_p = jnp.zeros((HID_PAD, 2), jnp.float32)
    p_p = p_p.at[:HID_DIM, 0].set(jnp.asarray(b1, jnp.float32).reshape(HID_DIM))
    p_p = p_p.at[:HID_DIM, 1].set(jnp.asarray(w2, jnp.float32).reshape(HID_DIM))
    b2_p = jnp.asarray(b2, jnp.float32).reshape(1, 1)

    x_bytes = jnp.dtype(x.dtype).itemsize
    cost = pl.CostEstimate(
        flops=2 * B * IN_DIM * HID_PAD + 4 * B * HID_PAD,
        transcendentals=B,                           # sigmoid
        bytes_accessed=(B * IN_DIM * x_bytes         # x (native dtype, read once)
                        + HID_PAD * IN_DIM * 2       # w1 (bf16)
                        + HID_PAD * 2 * 4 + 4        # [b1|w2], b2
                        + B * 4),                    # output
    )

    # Double-buffered x slab + headroom; >= 32 MiB so mis-detected chips still
    # compile, <= 48 MiB so it fits v7x's 64 MiB physical VMEM.
    vmem_limit = int(min(48 << 20,
                         max(32 << 20, 2 * tb * IN_DIM * x_bytes + (4 << 20))))

    out = pl.pallas_call(
        vgg10_dis_kernel,
        out_shape=jax.ShapeDtypeStruct((1, B), jnp.float32),
        grid_spec=pltpu.PrefetchScalarGridSpec(
            num_scalar_prefetch=0,
            grid=(n_tiles,),
            in_specs=[
                pl.BlockSpec((tb, IN_DIM), lambda i: (i, 0)),        # x tile (pipelined)
                pl.BlockSpec((HID_PAD, IN_DIM), lambda i: (0, 0)),   # w1 (resident)
                pl.BlockSpec((HID_PAD, 2), lambda i: (0, 0)),        # [b1 | w2] slab
                pl.BlockSpec(memory_space=pltpu.MemorySpace.SMEM),   # b2 scalar
            ],
            out_specs=pl.BlockSpec((1, tb), lambda i: (0, i)),       # lane-dense output
        ),
        compiler_params=pltpu.CompilerParams(
            dimension_semantics=("parallel",),
            vmem_limit_bytes=vmem_limit),
        cost_estimate=cost,
    )(x, w1_p, p_p, b2_p)

    # (1, B) with batch on lanes -> (B, 1)  (same linear order, free reshape)
    return out.reshape(B, 1)


def _reference(x, w1, b1, w2, b2):
    h = jnp.maximum(
        jnp.dot(x, w1.T, precision=jax.lax.Precision.HIGHEST) + b1, 0.0)
    y = jnp.dot(h, w2.T, precision=jax.lax.Precision.HIGHEST) + b2
    return jax.nn.sigmoid(y)


if __name__ == "__main__":
    key = jax.random.PRNGKey(0)
    kx, k1, k2, k3, k4 = jax.random.split(key, 5)

    # Deterministic parameter init (uniform, roughly matching nn.Linear scale).
    bound1 = 1.0 / (IN_DIM ** 0.5)
    bound2 = 1.0 / (HID_DIM ** 0.5)
    w1 = jax.random.uniform(k1, (HID_DIM, IN_DIM), jnp.float32, -bound1, bound1)
    b1 = jax.random.uniform(k2, (HID_DIM,), jnp.float32, -bound1, bound1)
    w2 = jax.random.uniform(k3, (OUT_DIM, HID_DIM), jnp.float32, -bound2, bound2)
    b2 = jax.random.uniform(k4, (OUT_DIM,), jnp.float32, -bound2, bound2)

    # Reference with the same bf16 quantization of x / w1 as the kernel applies.
    w1_q = w1.astype(jnp.bfloat16).astype(jnp.float32)

    def check(B, tb=None):
        xB = jax.random.normal(jax.random.fold_in(kx, B), (B, IN_DIM), jnp.float32)
        out = jax.block_until_ready(vgg10_dis_forward(xB, w1, b1, w2, b2, tb=tb))
        assert out.shape == (B, OUT_DIM)
        x_q = xB.astype(jnp.bfloat16).astype(jnp.float32)
        ref = _reference(x_q, w1_q, b1, w2, b2)
        assert jnp.allclose(out, ref, atol=2e-3, rtol=2e-3), f"mismatch (B={B})"

    check(16)             # single-tile path (blocks == full array dims)
    check(300, tb=128)    # tiled path with ragged tail (no wrapper-side padding)
    print("KERNEL_OK")
</pallas_src>

<mosaic_0001>
module attributes {stable_mosaic.version = 11 : i64} {
  func.func @vgg10_dis_kernel(%arg0: i32, %arg1: memref<16x512xf32, #tpu.memory_space<vmem>>, %arg2: memref<64x512xbf16, #tpu.memory_space<vmem>>, %arg3: memref<64x2xf32, #tpu.memory_space<vmem>>, %arg4: memref<1x1xf32, #tpu.memory_space<smem>>, %arg5: memref<1x16xf32, #tpu.memory_space<vmem>>) attributes {dimension_semantics = [#tpu.dimension_semantics<parallel>], iteration_bounds = array<i64: 1>, scalar_prefetch = 0 : i64, scratch_operands = 0 : i64, tpu.core_type = #tpu.core_type<tc>, window_params = [{transform_indices = @transform_0, window_bounds = array<i64: 16, 512>}, {pipeline_mode = #tpu.pipeline_mode<synchronous>, transform_indices = @transform_1, window_bounds = array<i64: 64, 512>}, {pipeline_mode = #tpu.pipeline_mode<synchronous>, transform_indices = @transform_2, window_bounds = array<i64: 64, 2>}, {transform_indices = @transform_3, window_bounds = array<i64: 1, 1>}, {transform_indices = @transform_4, window_bounds = array<i64: 1, 16>}]} {
    %c0 = arith.constant 0 : index
    %c0_0 = arith.constant 0 : index
    %0 = vector.load %arg1[%c0, %c0_0] : memref<16x512xf32, #tpu.memory_space<vmem>>, vector<16x512xf32>
    %1 = arith.truncf %0 : vector<16x512xf32> to vector<16x512xbf16>
    %c0_1 = arith.constant 0 : index
    %c0_2 = arith.constant 0 : index
    %2 = vector.load %arg2[%c0_1, %c0_2] : memref<64x512xbf16, #tpu.memory_space<vmem>>, vector<64x512xbf16>
    %cst = arith.constant dense<0.000000e+00> : vector<64x16xf32>
    %3 = tpu.matmul %2, %1, %cst {dimension_numbers = #tpu.dot_dimension_numbers<[1], [1], [0], [0], [0, 0, 1, 0], [], []>} : vector<64x512xbf16>, vector<16x512xbf16>, vector<64x16xf32> -> vector<64x16xf32>
    %c0_3 = arith.constant 0 : index
    %c0_4 = arith.constant 0 : index
    %4 = vector.load %arg3[%c0_3, %c0_4] : memref<64x2xf32, #tpu.memory_space<vmem>>, vector<64x1xf32>
    %c0_5 = arith.constant 0 : index
    %c1 = arith.constant 1 : index
    %5 = vector.load %arg3[%c0_5, %c1] : memref<64x2xf32, #tpu.memory_space<vmem>>, vector<64x1xf32>
    %6 = vector.broadcast %4 : vector<64x1xf32> to vector<64x16xf32>
    %7 = arith.addf %3, %6 : vector<64x16xf32>
    %cst_6 = arith.constant 0.000000e+00 : f32
    %8 = vector.broadcast %cst_6 : f32 to vector<64x16xf32>
    %9 = arith.maximumf %7, %8 : vector<64x16xf32>
    %10 = vector.broadcast %5 : vector<64x1xf32> to vector<64x16xf32>
    %11 = arith.mulf %9, %10 : vector<64x16xf32>
    %cst_7 = arith.constant dense<0.000000e+00> : vector<16xf32>
    %12 = vector.multi_reduction <add>, %11, %cst_7 [0] : vector<64x16xf32> to vector<16xf32>
    %13 = vector.shape_cast %12 : vector<16xf32> to vector<1x16xf32>
    %c0_8 = arith.constant 0 : index
    %c0_9 = arith.constant 0 : index
    %14 = memref.load %arg4[%c0_8, %c0_9] : memref<1x1xf32, #tpu.memory_space<smem>>
    %15 = vector.broadcast %14 : f32 to vector<1x16xf32>
    %16 = arith.addf %13, %15 : vector<1x16xf32>
    %17 = arith.negf %16 : vector<1x16xf32>
    %18 = math.exp %17 : vector<1x16xf32>
    %cst_10 = arith.constant 1.000000e+00 : f32
    %19 = vector.broadcast %cst_10 : f32 to vector<1x16xf32>
    %20 = arith.addf %19, %18 : vector<1x16xf32>
    %21 = arith.divf %19, %20 : vector<1x16xf32>
    %c0_11 = arith.constant 0 : index
    %c0_12 = arith.constant 0 : index
    %22 = vector.load %arg5[%c0_11, %c0_12] : memref<1x16xf32, #tpu.memory_space<vmem>>, vector<1x16xf32>
    tpu.vector_store %arg5[%c0_11, %c0_12], %21 {strides = array<i32>} : memref<1x16xf32, #tpu.memory_space<vmem>>, vector<1x16xf32>,
    return
  }
  func.func @transform_0(%arg0: i32) -> (i32, i32) {
    %c0_i32 = arith.constant 0 : i32
    %c0_i32_0 = arith.constant 0 : i32
    return %arg0, %c0_i32 : i32, i32
  }
  func.func @transform_1(%arg0: i32) -> (i32, i32) {
    %c0_i32 = arith.constant 0 : i32
    %c0_i32_0 = arith.constant 0 : i32
    %c0_i32_1 = arith.constant 0 : i32
    return %c0_i32, %c0_i32_0 : i32, i32
  }
  func.func @transform_2(%arg0: i32) -> (i32, i32) {
    %c0_i32 = arith.constant 0 : i32
    %c0_i32_0 = arith.constant 0 : i32
    %c0_i32_1 = arith.constant 0 : i32
    return %c0_i32, %c0_i32_0 : i32, i32
  }
  func.func @transform_3(%arg0: i32) -> (i32, i32) {
    %c0_i32 = arith.constant 0 : i32
    %c0_i32_0 = arith.constant 0 : i32
    %c0_i32_1 = arith.constant 0 : i32
    return %c0_i32, %c0_i32_0 : i32, i32
  }
  func.func @transform_4(%arg0: i32) -> (i32, i32) {
    %c0_i32 = arith.constant 0 : i32
    %c0_i32_0 = arith.constant 0 : i32
    return %c0_i32, %arg0 : i32, i32
  }
}

</mosaic_0001>

<llo_original>
// kernel: tpu_custom_call.1
$region0: #{tpu_custom_call.1}
  #allocation0 [shape = 'u32[]', space=smem, size = 0x4, offset = 0x4, fixed_abs, tag = 'smem constant byte address 0x4 - core index']
  #allocation1 [shape = 'u32[144,128]{1,0:T(1,128)}', space=vmem, size = 0x12000, scoped, tag = 'internal scratch']
  #allocation2 [shape = 'f32[1,1]{1,0:T(1,128)S(6)}', space=smem, size = 0x200, scoped, tag = 'scoped memory for tpu_custom_call.1']
  %s0 = inlined_call_operand.vmem [shape: f32[16,512], index: 0, kind: input, shape index: {}]
  %s1 = inlined_call_operand.hbm [shape: bf16[64,512], index: 1, kind: input, shape index: {}]
  %s2 = inlined_call_operand.vmem [shape: f32[64,2], index: 2, kind: input, shape index: {}]
  %s3 = inlined_call_operand.<no memory space> [shape: f32[1,1], index: 3, kind: input, shape index: {}]
  %s4 = inlined_call_operand.hbm [shape: f32[1,16], index: 4, kind: output, shape index: {}]
  %s5 = sld [smem:[#allocation0]]
  $region30: #{tpu_custom_call.1} parent=0
    _
  %s7 = ssub.s32 1, %s5
  %s8 = scalar_select 0, %s7, %s5
  %9 = sst [smem:[#allocation2]] %s3
  $region1: #{tpu_custom_call.1} parent=0
    #allocation3 [shape = 'u8[65536]{0}', space=vmem, size = 0x10000, scoped, tag = 'input window, operand 1, single buffered']
    #allocation4 [shape = 's32[1]{0}', space=sflag, size = 0x4, scoped, tag = 'scoped memory for tpu_custom_call.1']
    #allocation5 [shape = 's32[1]{0}', space=sflag, size = 0x4, scoped, tag = 'scoped memory for tpu_custom_call.1']
    #allocation6 [shape = 'u8[512]{0}', space=vmem, size = 0x400, scoped, tag = 'output window, operand 0, single buffered']
    %10 = vsyncpa [#allocation4], 0
    %11 = vsyncpa [#allocation5], 0
    // Predicated region
    $region2: #{tpu_custom_call.1} parent=1 // pred_check
      _
    $region3: #{tpu_custom_call.1} parent=1 // pred_check_branch
      %13 = sbr.rel (0) target = $region5
    $region4: #{tpu_custom_call.1} parent=1 // pred_region
      _
    $region5: #{tpu_custom_call.1} parent=1 // pred_fallthru
      _
    // Predicated region
    $region6: #{tpu_custom_call.1} parent=1 // pred_check
      _
    $region7: #{tpu_custom_call.1} parent=1 // pred_check_branch
      %15 = sbr.rel (0) target = $region9
    $region8: #{tpu_custom_call.1} parent=1 // pred_region
      %s17 = ssub.s32 2048, 2048
      %18 = vsyncadd [#allocation4], %s17
      %s19 = sshll.u32 [#allocation3], 4
      %s20 = int_to_ptr.vmem [resolvable:$true] %s19
      %25 = dma.hbm_to_vmem [thread:$0]  %s1, 2048, %s20, [#allocation4], 256, 256, 16
    $region9: #{tpu_custom_call.1} parent=1 // pred_fallthru
      _
    // Predicated region
    $region10: #{tpu_custom_call.1} parent=1 // pred_check
      _
    $region11: #{tpu_custom_call.1} parent=1 // pred_check_branch
      %27 = sbr.rel (0) target = $region13
    $region12: #{tpu_custom_call.1} parent=1 // pred_region
      _
    $region13: #{tpu_custom_call.1} parent=1 // pred_fallthru
      _
    // Predicated region
    $region14: #{tpu_custom_call.1} parent=1 // pred_check
      _
    $region15: #{tpu_custom_call.1} parent=1 // pred_check_branch
      %29 = sbr.rel (0) target = $region17
    $region16: #{tpu_custom_call.1} parent=1 // pred_region
      _
    $region17: #{tpu_custom_call.1} parent=1 // pred_fallthru
      _
    // Predicated region
    $region18: #{tpu_custom_call.1} parent=1 // pred_check
      _
    $region19: #{tpu_custom_call.1} parent=1 // pred_check_branch
      %31 = sbr.rel (0) target = $region21
    $region20: #{tpu_custom_call.1} parent=1 // pred_region
      %32 = dma.done [#allocation4], 2048
    $region21: #{tpu_custom_call.1} parent=1 // pred_fallthru
      _
    %v34 = vld [vmem:[%s0] sm:$0xff]
    %v35 = vld [vmem:[%s0 + $0x8] sm:$0xff]
    %v36 = vld [vmem:[%s0 + $0x10] sm:$0xff]
    %v37 = vld [vmem:[%s0 + $0x18] sm:$0xff]
    %v38 = vld [vmem:[%s0 + $0x20] sm:$0xff]
    %v39 = vld [vmem:[%s0 + $0x28] sm:$0xff]
    %v40 = vld [vmem:[%s0 + $0x30] sm:$0xff]
    %v41 = vld [vmem:[%s0 + $0x38] sm:$0xff]
    %v42 = vpack.c.bf16 %v38, %v34
    %v43 = vpack.c.bf16 %v39, %v35
    %v44 = vpack.c.bf16 %v40, %v36
    %v45 = vpack.c.bf16 %v41, %v37
    %v46 = vld [vmem:[#allocation3] sm:$0xff]
    %v47 = vld [vmem:[#allocation3 + $0x8] sm:$0xff]
    %v48 = vld [vmem:[#allocation3 + $0x10] sm:$0xff]
    %v49 = vld [vmem:[#allocation3 + $0x18] sm:$0xff]
    %v50 = vld [vmem:[#allocation3 + $0x20] sm:$0xff]
    %v51 = vld [vmem:[#allocation3 + $0x28] sm:$0xff]
    %v52 = vld [vmem:[#allocation3 + $0x30] sm:$0xff]
    %v53 = vld [vmem:[#allocation3 + $0x38] sm:$0xff]
    %v54 = vld [vmem:[#allocation3 + $0x40] sm:$0xff]
    %v55 = vld [vmem:[#allocation3 + $0x48] sm:$0xff]
    %v56 = vld [vmem:[#allocation3 + $0x50] sm:$0xff]
    %v57 = vld [vmem:[#allocation3 + $0x58] sm:$0xff]
    %v58 = vld [vmem:[#allocation3 + $0x60] sm:$0xff]
    %v59 = vld [vmem:[#allocation3 + $0x68] sm:$0xff]
    %v60 = vld [vmem:[#allocation3 + $0x70] sm:$0xff]
    %v61 = vld [vmem:[#allocation3 + $0x78] sm:$0xff]
    %v62 = vld [vmem:[%s2] sm:$0xff]
    %v63 = vld [vmem:[%s2 + $0x8] sm:$0xff]
    %v64 = vld [vmem:[%s2 + $0x10] sm:$0xff]
    %v65 = vld [vmem:[%s2 + $0x18] sm:$0xff]
    %v66 = vld [vmem:[%s2 + $0x20] sm:$0xff]
    %v67 = vld [vmem:[%s2 + $0x28] sm:$0xff]
    %v68 = vld [vmem:[%s2 + $0x30] sm:$0xff]
    %v69 = vld [vmem:[%s2 + $0x38] sm:$0xff]
    %71 = vset.pattern.permute.xlu0 0
    %72 = vperm.xlu0 %71, %v62
    %v73 = vpop.permute.xlu0 %72
    %76 = vset.pattern.permute.xlu0 0
    %77 = vperm.xlu0 %76, %v63
    %v78 = vpop.permute.xlu0 %77
    %81 = vset.pattern.permute.xlu0 0
    %82 = vperm.xlu0 %81, %v64
    %v83 = vpop.permute.xlu0 %82
    %86 = vset.pattern.permute.xlu0 0
    %87 = vperm.xlu0 %86, %v65
    %v88 = vpop.permute.xlu0 %87
    %91 = vset.pattern.permute.xlu0 0
    %92 = vperm.xlu0 %91, %v66
    %v93 = vpop.permute.xlu0 %92
    %96 = vset.pattern.permute.xlu0 0
    %97 = vperm.xlu0 %96, %v67
    %v98 = vpop.permute.xlu0 %97
    %101 = vset.pattern.permute.xlu0 0
    %102 = vperm.xlu0 %101, %v68
    %v103 = vpop.permute.xlu0 %102
    %106 = vset.pattern.permute.xlu0 0
    %107 = vperm.xlu0 %106, %v69
    %v108 = vpop.permute.xlu0 %107
    %v126 = vunpack.c.l.b16 %v46
    %v127 = vunpack.c.h.b16 %v46
    %v128 = vunpack.c.l.b16 %v47
    %v129 = vunpack.c.h.b16 %v47
    %v130 = vunpack.c.l.b16 %v48
    %v131 = vunpack.c.h.b16 %v48
    %v132 = vunpack.c.l.b16 %v49
    %v133 = vunpack.c.h.b16 %v49
    %v134 = vunpack.c.l.b16 %v50
    %v135 = vunpack.c.h.b16 %v50
    %v136 = vunpack.c.l.b16 %v51
    %v137 = vunpack.c.h.b16 %v51
    %v138 = vunpack.c.l.b16 %v52
    %v139 = vunpack.c.h.b16 %v52
    %v140 = vunpack.c.l.b16 %v53
    %v141 = vunpack.c.h.b16 %v53
    %v142 = vunpack.c.l.b16 %v54
    %v143 = vunpack.c.h.b16 %v54
    %v144 = vunpack.c.l.b16 %v55
    %v145 = vunpack.c.h.b16 %v55
    %v146 = vunpack.c.l.b16 %v56
    %v147 = vunpack.c.h.b16 %v56
    %v148 = vunpack.c.l.b16 %v57
    %v149 = vunpack.c.h.b16 %v57
    %v150 = vunpack.c.l.b16 %v58
    %v151 = vunpack.c.h.b16 %v58
    %v152 = vunpack.c.l.b16 %v59
    %v153 = vunpack.c.h.b16 %v59
    %v154 = vunpack.c.l.b16 %v60
    %v155 = vunpack.c.h.b16 %v60
    %v156 = vunpack.c.l.b16 %v61
    %v157 = vunpack.c.h.b16 %v61
    %v158 = vpack.c.b16 %v130, %v126
    %v159 = vpack.c.b16 %v131, %v127
    %v160 = vpack.c.b16 %v132, %v128
    %v161 = vpack.c.b16 %v133, %v129
    %v162 = vpack.c.b16 %v138, %v134
    %v163 = vpack.c.b16 %v139, %v135
    %v164 = vpack.c.b16 %v140, %v136
    %v165 = vpack.c.b16 %v141, %v137
    %v166 = vpack.c.b16 %v146, %v142
    %v167 = vpack.c.b16 %v147, %v143
    %v168 = vpack.c.b16 %v148, %v144
    %v169 = vpack.c.b16 %v149, %v145
    %v170 = vpack.c.b16 %v154, %v150
    %v171 = vpack.c.b16 %v155, %v151
    %v172 = vpack.c.b16 %v156, %v152
    %v173 = vpack.c.b16 %v157, %v153
    %190 = vmatprep.subr.bf16.mxu0 0
    %191 = vmatpush1.bf16.xpose.msra.mxu0 0
    %192 = vmatprep.subr.bf16.mxu0 0
    %193 = vmatpush1.bf16.xpose.msra.mxu0 0
    %194 = vmatprep.subr.bf16.mxu0 0
    %195 = vmatpush1.bf16.xpose.msra.mxu0 0
    %196 = vmatprep.subr.bf16.mxu0 0
    %197 = vmatpush1.bf16.xpose.msra.mxu0 0
    %198 = vmatprep.subr.bf16.mxu0 0
    %199 = vmatpush1.bf16.xpose.msra.mxu0 0
    %200 = vmatprep.subr.bf16.mxu0 0
    %201 = vmatpush1.bf16.xpose.msra.mxu0 0
    %202 = vmatprep.subr.bf16.mxu0 0
    %203 = vmatpush1.bf16.xpose.msra.mxu0 0
    %204 = vmatprep.subr.bf16.mxu0 %v43
    %205 = vmatpush1.bf16.xpose.msra.mxu0 %v42
    %206 = vmatprep.subr.bf16.mxu0 0
    %207 = vmatpush2.bf16.xpose.msra.mxu0 0
    %208 = vmatprep.subr.bf16.mxu0 0
    %209 = vmatpush2.bf16.xpose.msra.mxu0 0
    %210 = vmatprep.subr.bf16.mxu0 0
    %211 = vmatpush2.bf16.xpose.msra.mxu0 0
    %212 = vmatprep.subr.bf16.mxu0 0
    %213 = vmatpush2.bf16.xpose.msra.mxu0 0
    %214 = vmatprep.subr.bf16.mxu0 0
    %215 = vmatpush2.bf16.xpose.msra.mxu0 0
    %216 = vmatprep.subr.bf16.mxu0 0
    %217 = vmatpush2.bf16.xpose.msra.mxu0 0
    %218 = vmatprep.subr.bf16.mxu0 0
    %219 = vmatpush2.bf16.xpose.msra.mxu0 0
    %220 = vmatprep.subr.bf16.mxu0 0
    %221 = vmatpush2.bf16.xpose.msra.mxu0 0
    %222 = vmatprep.mubr.bf16.mxu0 %v159
    %223 = vmatmul.mubr.bf16.gmra.mxu0 %v158
    %v224 = vpop.f32.mrf.mxu0
    %v225 = vadd.f32 %v73, %v224
    %v226 = vpop.f32.mrf.mxu0
    %v227 = vpop.f32.mrf.mxu0
    %v228 = vadd.f32 %v78, %v227
    %v229 = vpop.f32.mrf.mxu0
    %230 = vmatprep.mubr.bf16.mxu0 %v163
    %231 = vmatmul.mubr.bf16.gmra.mxu0 %v162
    %v232 = vpop.f32.mrf.mxu0
    %v233 = vadd.f32 %v83, %v232
    %v234 = vpop.f32.mrf.mxu0
    %v235 = vpop.f32.mrf.mxu0
    %v236 = vadd.f32 %v88, %v235
    %v237 = vpop.f32.mrf.mxu0
    %238 = vmatprep.mubr.bf16.mxu0 %v167
    %239 = vmatmul.mubr.bf16.gmra.mxu0 %v166
    %v240 = vpop.f32.mrf.mxu0
    %v241 = vadd.f32 %v93, %v240
    %v242 = vpop.f32.mrf.mxu0
    %v243 = vpop.f32.mrf.mxu0
    %v244 = vadd.f32 %v98, %v243
    %v245 = vpop.f32.mrf.mxu0
    %246 = vmatprep.mubr.bf16.mxu0 %v171
    %247 = vmatmul.mubr.bf16.gmra.mxu0 %v170
    %v248 = vpop.f32.mrf.mxu0
    %v249 = vadd.f32 %v103, %v248
    %v250 = vpop.f32.mrf.mxu0
    %v251 = vpop.f32.mrf.mxu0
    %v252 = vadd.f32 %v108, %v251
    %v253 = vpop.f32.mrf.mxu0
    %254 = vdwg.mxu0
    %255 = vmatprep.subr.bf16.mxu0 0
    %256 = vmatpush1.bf16.xpose.msra.mxu0 0
    %257 = vmatprep.subr.bf16.mxu0 0
    %258 = vmatpush1.bf16.xpose.msra.mxu0 0
    %259 = vmatprep.subr.bf16.mxu0 0
    %260 = vmatpush1.bf16.xpose.msra.mxu0 0
    %261 = vmatprep.subr.bf16.mxu0 0
    %262 = vmatpush1.bf16.xpose.msra.mxu0 0
    %263 = vmatprep.subr.bf16.mxu0 0
    %264 = vmatpush1.bf16.xpose.msra.mxu0 0
    %265 = vmatprep.subr.bf16.mxu0 0
    %266 = vmatpush1.bf16.xpose.msra.mxu0 0
    %267 = vmatprep.subr.bf16.mxu0 0
    %268 = vmatpush1.bf16.xpose.msra.mxu0 0
    %269 = vmatprep.subr.bf16.mxu0 %v45
    %270 = vmatpush1.bf16.xpose.msra.mxu0 %v44
    %271 = vmatprep.subr.bf16.mxu0 0
    %272 = vmatpush2.bf16.xpose.msra.mxu0 0
    %273 = vmatprep.subr.bf16.mxu0 0
    %274 = vmatpush2.bf16.xpose.msra.mxu0 0
    %275 = vmatprep.subr.bf16.mxu0 0
    %276 = vmatpush2.bf16.xpose.msra.mxu0 0
    %277 = vmatprep.subr.bf16.mxu0 0
    %278 = vmatpush2.bf16.xpose.msra.mxu0 0
    %279 = vmatprep.subr.bf16.mxu0 0
    %280 = vmatpush2.bf16.xpose.msra.mxu0 0
    %281 = vmatprep.subr.bf16.mxu0 0
    %282 = vmatpush2.bf16.xpose.msra.mxu0 0
    %283 = vmatprep.subr.bf16.mxu0 0
    %284 = vmatpush2.bf16.xpose.msra.mxu0 0
    %285 = vmatprep.subr.bf16.mxu0 0
    %286 = vmatpush2.bf16.xpose.msra.mxu0 0
    %287 = vmatprep.mubr.bf16.mxu0 %v161
    %288 = vmatmul.mubr.bf16.gmra.mxu0 %v160
    %v289 = vpop.f32.mrf.mxu0
    %v290 = vadd.f32 %v225, %v289
    %v291 = vpop.f32.mrf.mxu0
    %v292 = vpop.f32.mrf.mxu0
    %v293 = vadd.f32 %v228, %v292
    %v294 = vpop.f32.mrf.mxu0
    %295 = vmatprep.mubr.bf16.mxu0 %v165
    %296 = vmatmul.mubr.bf16.gmra.mxu0 %v164
    %v297 = vpop.f32.mrf.mxu0
    %v298 = vadd.f32 %v233, %v297
    %v299 = vpop.f32.mrf.mxu0
    %v300 = vpop.f32.mrf.mxu0
    %v301 = vadd.f32 %v236, %v300
    %v302 = vpop.f32.mrf.mxu0
    %303 = vmatprep.mubr.bf16.mxu0 %v169
    %304 = vmatmul.mubr.bf16.gmra.mxu0 %v168
    %v305 = vpop.f32.mrf.mxu0
    %v306 = vadd.f32 %v241, %v305
    %v307 = vpop.f32.mrf.mxu0
    %v308 = vpop.f32.mrf.mxu0
    %v309 = vadd.f32 %v244, %v308
    %v310 = vpop.f32.mrf.mxu0
    %311 = vmatprep.mubr.bf16.mxu0 %v173
    %312 = vmatmul.mubr.bf16.gmra.mxu0 %v172
    %v313 = vpop.f32.mrf.mxu0
    %v314 = vadd.f32 %v249, %v313
    %v315 = vpop.f32.mrf.mxu0
    %v316 = vpop.f32.mrf.mxu0
    %v317 = vadd.f32 %v252, %v316
    %v318 = vpop.f32.mrf.mxu0
    %319 = vdwg.mxu0
    %v320 = vmax.f32 %v290, 0.0
    %v321 = vmax.f32 %v293, 0.0
    %v322 = vmax.f32 %v298, 0.0
    %v323 = vmax.f32 %v301, 0.0
    %v324 = vmax.f32 %v306, 0.0
    %v325 = vmax.f32 %v309, 0.0
    %v326 = vmax.f32 %v314, 0.0
    %v327 = vmax.f32 %v317, 0.0
    %328 = vset.pattern.permute.xlu0 1
    %329 = vperm.xlu0 %328, %v62
    %v330 = vpop.permute.xlu0 %329
    %332 = vset.pattern.permute.xlu0 1
    %333 = vperm.xlu0 %332, %v63
    %v334 = vpop.permute.xlu0 %333
    %336 = vset.pattern.permute.xlu0 1
    %337 = vperm.xlu0 %336, %v64
    %v338 = vpop.permute.xlu0 %337
    %340 = vset.pattern.permute.xlu0 1
    %341 = vperm.xlu0 %340, %v65
    %v342 = vpop.permute.xlu0 %341
    %344 = vset.pattern.permute.xlu0 1
    %345 = vperm.xlu0 %344, %v66
    %v346 = vpop.permute.xlu0 %345
    %348 = vset.pattern.permute.xlu0 1
    %349 = vperm.xlu0 %348, %v67
    %v350 = vpop.permute.xlu0 %349
    %352 = vset.pattern.permute.xlu0 1
    %353 = vperm.xlu0 %352, %v68
    %v354 = vpop.permute.xlu0 %353
    %356 = vset.pattern.permute.xlu0 1
    %357 = vperm.xlu0 %356, %v69
    %v358 = vpop.permute.xlu0 %357
    %v360 = vmul.f32 %v320, %v330
    %v361 = vmul.f32 %v321, %v334
    %v362 = vmul.f32 %v322, %v338
    %v363 = vmul.f32 %v323, %v342
    %v364 = vmul.f32 %v324, %v346
    %v365 = vmul.f32 %v325, %v350
    %v366 = vmul.f32 %v326, %v354
    %v367 = vmul.f32 %v327, %v358
    %vm368 = vcmask 130048
    %v369 = vsel %vm368, %v360, 0.0
    %v370 = vsel %vm368, %v361, 0.0
    %v371 = vadd.f32 %v369, %v370
    %v372 = vsel %vm368, %v362, 0.0
    %v373 = vadd.f32 %v371, %v372
    %v374 = vsel %vm368, %v363, 0.0
    %v375 = vadd.f32 %v373, %v374
    %v376 = vsel %vm368, %v364, 0.0
    %v377 = vadd.f32 %v375, %v376
    %v378 = vsel %vm368, %v365, 0.0
    %v379 = vadd.f32 %v377, %v378
    %v380 = vsel %vm368, %v366, 0.0
    %v381 = vadd.f32 %v379, %v380
    %v382 = vsel %vm368, %v367, 0.0
    %v383 = vadd.f32 %v381, %v382
    %v384 = vrot.slane %v383, 4
    %v385 = vadd.f32 %v383, %v384
    %v386 = vrot.slane %v385, 2
    %v387 = vadd.f32 %v385, %v386
    %v388 = vrot.slane %v387, 1
    %v389 = vadd.f32 %v387, %v388
    %s390 = sld [smem:[#allocation2]]
    %v391 = vstv %s390
    %v392 = vadd.f32 %v389, %v391
    %v393 = vxor.u32 %v392, 2147483648
    %v394 = vmul.f32 %v393, 1.442695
    %v395 = vpow.pop %v394
    %v396 = vadd.f32 %v395, 1.0
    %v397 = vrcp.pop %v396
    %v398 = vmul.f32 1.0, %v397
    %vm399 = vcmask 122880
    %400 = vst.msk [vmem:[#allocation6] sm:$0x1] %vm399, %v398
    // Predicated region
    $region22: #{tpu_custom_call.1} parent=1 // pred_check
      _
    $region23: #{tpu_custom_call.1} parent=1 // pred_check_branch
      %402 = sbr.rel (0) target = $region25
    $region24: #{tpu_custom_call.1} parent=1 // pred_region
      %s404 = ssub.s32 16, 16
      %405 = vsyncadd [#allocation5], %s404
      %s407 = sshll.u32 [#allocation6], 4
      %s408 = int_to_ptr.vmem [resolvable:$true] %s407
      %410 = dma.vmem_to_hbm [thread:$0]  %s408, 16, %s4, [#allocation5]
    $region25: #{tpu_custom_call.1} parent=1 // pred_fallthru
      _
    // Predicated region
    $region26: #{tpu_custom_call.1} parent=1 // pred_check
      _
    $region27: #{tpu_custom_call.1} parent=1 // pred_check_branch
      %412 = sbr.rel (0) target = $region29
    $region28: #{tpu_custom_call.1} parent=1 // pred_region
      %413 = dma.done [#allocation5], 16
    $region29: #{tpu_custom_call.1} parent=1 // pred_fallthru
      _
    %414 = vsyncpa [#allocation4], 1
    %415 = vsyncpa [#allocation5], 1

</llo_original>
